<compile_context>
chip_gen: v6e
topology: v6e:2x2x1
jax: 0.10.0
libtpu: 0.0.40
codegen_flags: <defaults>
</compile_context>

<pallas_src>
import jax
import jax.numpy as jnp
from jax import lax
from jax.experimental import pallas as pl
from jax.experimental.pallas import tpu as pltpu


def _round_up(x, m):
    return ((x + m - 1) // m) * m


def _vmem_limit_bytes(estimate):
    """Generation-aware VMEM limit: cap at 75% of the chip's VMEM capacity."""
    cap = 64 * 1024 * 1024  # conservative fallback (v7x per-TC VMEM)
    try:
        info = pltpu.get_tpu_info()
        cap = int(getattr(info, "vmem_capacity_bytes", cap)) or cap
    except Exception:
        pass
    return int(min(max(int(estimate), 16 * 1024 * 1024), int(cap * 0.75)))


# --------------------------------------------------------------------------
# Kernel 1: time-parallel input projection  gin = emb @ Wih0 + b0
#   (no recurrent dependency -> one big tiled matmul off the serial path;
#    f32 accumulation, bf16 store to halve the dominant HBM stream)
# --------------------------------------------------------------------------
def _input_proj_kernel(emb_ref, wih0_ref, b0_ref, gin_ref):
    # emb_ref: [TM, Ep] bf16, wih0_ref: [Ep, 4Hp] bf16, b0_ref: [1, 4Hp] f32
    acc = jnp.dot(emb_ref[...], wih0_ref[...],
                  preferred_element_type=jnp.float32) + b0_ref[...]
    gin_ref[...] = acc.astype(gin_ref.dtype)          # bf16 store


# --------------------------------------------------------------------------
# Kernel 2: sequential recurrence, streaming the precomputed gate inputs.
# Grid = (batch_tiles [parallel], time_tiles [arbitrary]); h/c in VMEM scratch.
# Layer-1 input & recurrent matmuls fused into one K = 2*Hp contraction.
# --------------------------------------------------------------------------
def _lstm_recurrent_kernel(gin_ref, len_ref,
                           whh0_ref, wl1_ref, b1_ref,
                           wout_ref, bout_ref,
                           out_ref,
                           h0_ref, c0_ref, h1_ref, c1_ref):
    t_idx = pl.program_id(1)
    n_t = pl.num_programs(1)
    TT, Bt, G = gin_ref.shape
    Hp = whh0_ref.shape[0]

    @pl.when(t_idx == 0)
    def _():
        z = jnp.zeros((Bt, Hp), jnp.float32)
        h0_ref[...] = z
        c0_ref[...] = z
        h1_ref[...] = z
        c1_ref[...] = z

    whh0 = whh0_ref[...]                              # bf16 [Hp, 4Hp]
    wl1 = wl1_ref[...]                                # bf16 [2Hp, 4Hp]
    b1 = jnp.broadcast_to(b1_ref[...], (Bt, G))       # hoisted broadcast (f32)
    lens = len_ref[...]                               # [Bt, 1] int32

    def gates_to_hc(gates, c):
        # gate slices are whole 128-lane tiles because Hp % 128 == 0
        i_g = jax.nn.sigmoid(gates[:, 0 * Hp:1 * Hp])
        f_g = jax.nn.sigmoid(gates[:, 1 * Hp:2 * Hp])
        g_g = jnp.tanh(gates[:, 2 * Hp:3 * Hp])
        o_g = jax.nn.sigmoid(gates[:, 3 * Hp:4 * Hp])
        c_new = f_g * c + i_g * g_g
        h_new = o_g * jnp.tanh(c_new)
        return h_new, c_new

    def step(tt, carry):
        h0, c0, h1, c1 = carry
        t = t_idx * TT + tt
        # layer 0: x@Wih0 + b0 already precomputed -> only h@Whh0 per step
        g0 = gin_ref[tt].astype(jnp.float32) + jnp.dot(
            h0.astype(jnp.bfloat16), whh0, preferred_element_type=jnp.float32)
        h0, c0 = gates_to_hc(g0, c0)
        # NOTE: no masking on layer-0 state.  Once a sequence ends, layer-1
        # state is frozen, so stale h0/c0 can never reach the output (hn[1]).
        # layer 1: fused [h0_new | h1] @ [Wih1; Whh1]  (one K=2Hp MXU push)
        x1 = jnp.concatenate(
            [h0.astype(jnp.bfloat16), h1.astype(jnp.bfloat16)], axis=-1)
        g1 = jnp.dot(x1, wl1, preferred_element_type=jnp.float32) + b1
        h1n, c1n = gates_to_hc(g1, c1)
        valid = t < lens                    # pack_padded: freeze past seq end
        h1 = jnp.where(valid, h1n, h1)
        c1 = jnp.where(valid, c1n, c1)
        return h0, c0, h1, c1

    carry = (h0_ref[...], c0_ref[...], h1_ref[...], c1_ref[...])
    carry = lax.fori_loop(0, TT, step, carry, unroll=min(4, TT))
    h0_ref[...], c0_ref[...], h1_ref[...], c1_ref[...] = carry

    @pl.when(t_idx == n_t - 1)
    def _():
        # logits = Linear(hn[1]); Vp is a multiple of 128 -> lane-dense store
        out_ref[...] = (
            jnp.dot(h1_ref[...].astype(jnp.bfloat16), wout_ref[...],
                    preferred_element_type=jnp.float32)
            + bout_ref[...]
        )


# --------------------------------------------------------------------------
# Parameter prep helpers (pre-transpose, pad each gate block to Hp lanes)
# --------------------------------------------------------------------------
def _prep_ih(w, H, Hp, In, Inp):
    """PyTorch [4H, In] weight -> [Inp, 4Hp], keeping i/f/g/o blocks separate."""
    wt = jnp.transpose(w)                             # [In, 4H]
    wt = jnp.pad(wt, ((0, Inp - In), (0, 0)))
    w4 = wt.reshape(Inp, 4, H)
    w4 = jnp.pad(w4, ((0, 0), (0, 0), (0, Hp - H)))
    return w4.reshape(Inp, 4 * Hp)


def _prep_bias(b, H, Hp):
    b4 = b.reshape(4, H)
    b4 = jnp.pad(b4, ((0, 0), (0, Hp - H)))
    return b4.reshape(1, 4 * Hp)


# --------------------------------------------------------------------------
# Wrapper
# --------------------------------------------------------------------------
def bilstm_p_forward(inputs, seq_lengths, params, *, time_tile=16, batch_tile=None):
    """Train-mode forward of BiLSTM_P. inputs: int32 [B,S], seq_lengths: int32 [B]."""
    emb_table = params["embedding"]                   # [VOCAB, E]
    B, S = inputs.shape
    E = emb_table.shape[1]
    H = params["whh0"].shape[1]
    V = params["wout"].shape[0]

    TT = int(time_tile)
    # Pad the batch to at least 16 rows (bf16 sublane pack); for real
    # workloads use MXU-height batch tiles (the recurrence is serial in time,
    # so batch is the only axis that fills the MXU), and with n_b >= 2 the
    # "parallel" batch axis shards across v7x's two TensorCores.
    Bp = _round_up(max(B, 16), 16)
    if batch_tile is None:
        if Bp % 256 == 0:
            batch_tile = 256
        elif Bp % 128 == 0:
            batch_tile = 128
        else:
            batch_tile = Bp
    Bt = int(batch_tile)
    Bp = _round_up(Bp, Bt)
    Hp = _round_up(H, 128)
    Ep = _round_up(E, 128)
    Vp = _round_up(V, 128)
    Sp = _round_up(S, TT)
    G = 4 * Hp

    bf16 = jnp.bfloat16

    # ---- glue: one-pass embedding gather straight into the padded,
    # time-major, bf16 layout kernel 1 consumes (dropout = identity).
    emb_table_p = jnp.pad(emb_table, ((0, 0), (0, Ep - E))).astype(bf16)  # [Vocab, Ep]
    ids_tm = jnp.zeros((Sp, Bp), jnp.int32).at[:S, :B].set(
        jnp.transpose(inputs).astype(jnp.int32))
    emb_flat = jnp.take(emb_table_p, ids_tm.reshape(-1), axis=0)          # [Sp*Bp, Ep]
    # TODO(synk): for very large vocab/E, gather rows inside kernel 1 via
    # PrefetchScalarGridSpec + pl.Element instead of materializing emb_flat.

    lens = jnp.zeros((Bp, 1), jnp.int32).at[:B, 0].set(seq_lengths.astype(jnp.int32))
    # TODO(synk): lens could live in SMEM via scalar prefetch; kept as a tiny
    # VMEM block for portability.

    # ---- weights: pre-transpose, pad, bf16 for the MXU (biases stay f32)
    wih0 = _prep_ih(params["wih0"], H, Hp, E, Ep).astype(bf16)   # [Ep, G]
    whh0 = _prep_ih(params["whh0"], H, Hp, H, Hp).astype(bf16)   # [Hp, G]
    # layer-1: stack [Wih1; Whh1] -> one fused K = 2*Hp contraction per step
    wl1 = jnp.concatenate(
        [_prep_ih(params["wih1"], H, Hp, H, Hp),
         _prep_ih(params["whh1"], H, Hp, H, Hp)], axis=0).astype(bf16)   # [2Hp, G]
    b0 = _prep_bias(params["bih0"] + params["bhh0"], H, Hp)      # [1, G] f32
    b1 = _prep_bias(params["bih1"] + params["bhh1"], H, Hp)      # [1, G] f32
    wout = jnp.pad(jnp.transpose(params["wout"]),
                   ((0, Hp - H), (0, Vp - V))).astype(bf16)      # [Hp, Vp]
    bout = jnp.pad(params["bout"], (0, Vp - V)).reshape(1, Vp)   # [1, Vp] f32

    n_t = Sp // TT
    n_b = Bp // Bt
    TM = TT * Bp                                      # rows per projection block

    # ---- kernel 1: hoisted input projection over all S*B rows --------------
    proj_vmem = (2 * TM * Ep * 2           # emb blocks (double-buffered, bf16)
                 + 2 * (Ep * G * 2 + G * 4)  # resident weight + bias (x2 bufs)
                 + 2 * TM * G * 2          # bf16 output blocks (double-buffered)
                 + (4 << 20))
    gin_flat = pl.pallas_call(
        _input_proj_kernel,
        out_shape=jax.ShapeDtypeStruct((Sp * Bp, G), bf16),
        grid=(n_t,),
        in_specs=[pl.BlockSpec((TM, Ep), lambda i: (i, 0)),
                  pl.BlockSpec((Ep, G), lambda i: (0, 0)),
                  pl.BlockSpec((1, G), lambda i: (0, 0))],
        out_specs=pl.BlockSpec((TM, G), lambda i: (i, 0)),
        compiler_params=pltpu.CompilerParams(
            dimension_semantics=("parallel",),
            vmem_limit_bytes=_vmem_limit_bytes(proj_vmem)),
    )(emb_flat, wih0, b0)
    gin = gin_flat.reshape(Sp, Bp, G)                  # free row-major reshape

    # ---- kernel 2: sequential recurrence, streaming bf16 gin over time -----
    rec_vmem = (2 * TT * Bt * G * 2        # streamed bf16 gate inputs (x2 bufs)
                + 2 * (Hp * G * 2 + 2 * Hp * G * 2      # whh0 + fused wl1
                       + Hp * Vp * 2 + (G + Vp) * 4)    # wout + biases
                + 2 * Bt * Vp * 4          # logits block
                + 4 * Bt * Hp * 4          # h/c scratch
                + (4 << 20))
    # TODO(synk): on v7x with large Hp, single-buffer the constant-index weight
    # blocks (pipeline_mode=pl.Buffered(1)) to stay inside the 64 MiB VMEM.
    logits_p = pl.pallas_call(
        _lstm_recurrent_kernel,
        out_shape=jax.ShapeDtypeStruct((Bp, Vp), jnp.float32),
        grid=(n_b, n_t),
        in_specs=[pl.BlockSpec((TT, Bt, G), lambda b, t: (t, b, 0)),   # gin (bf16)
                  pl.BlockSpec((Bt, 1), lambda b, t: (b, 0)),          # lens
                  pl.BlockSpec((Hp, G), lambda b, t: (0, 0)),          # whh0
                  pl.BlockSpec((2 * Hp, G), lambda b, t: (0, 0)),      # fused wl1
                  pl.BlockSpec((1, G), lambda b, t: (0, 0)),           # b1
                  pl.BlockSpec((Hp, Vp), lambda b, t: (0, 0)),         # wout
                  pl.BlockSpec((1, Vp), lambda b, t: (0, 0))],         # bout
        out_specs=pl.BlockSpec((Bt, Vp), lambda b, t: (b, 0)),
        scratch_shapes=[pltpu.VMEM((Bt, Hp), jnp.float32) for _ in range(4)],
        compiler_params=pltpu.CompilerParams(
            dimension_semantics=("parallel", "arbitrary"),
            vmem_limit_bytes=_vmem_limit_bytes(rec_vmem)),
    )(gin, lens, whh0, wl1, b1, wout, bout)

    return logits_p[:B, :V]


# --------------------------------------------------------------------------
# Pure-JAX reference (mirrors PyTorch semantics, full f32)
# --------------------------------------------------------------------------
def _reference_forward(inputs, seq_lengths, params):
    emb = jnp.take(params["embedding"], inputs, axis=0)     # [B, S, E]
    B, S, _ = emb.shape
    H = params["whh0"].shape[1]

    def cell(x, h, c, wih, whh, bih, bhh):
        gates = x @ wih.T + bih + h @ whh.T + bhh
        i = jax.nn.sigmoid(gates[:, 0 * H:1 * H])
        f = jax.nn.sigmoid(gates[:, 1 * H:2 * H])
        g = jnp.tanh(gates[:, 2 * H:3 * H])
        o = jax.nn.sigmoid(gates[:, 3 * H:4 * H])
        c_new = f * c + i * g
        return o * jnp.tanh(c_new), c_new

    h0 = c0 = h1 = c1 = jnp.zeros((B, H), jnp.float32)
    lens = seq_lengths.reshape(B, 1)
    for t in range(S):
        valid = t < lens
        h0n, c0n = cell(emb[:, t, :], h0, c0,
                        params["wih0"], params["whh0"], params["bih0"], params["bhh0"])
        h0 = jnp.where(valid, h0n, h0)
        c0 = jnp.where(valid, c0n, c0)
        h1n, c1n = cell(h0, h1, c1,
                        params["wih1"], params["whh1"], params["bih1"], params["bhh1"])
        h1 = jnp.where(valid, h1n, h1)
        c1 = jnp.where(valid, c1n, c1)
    return h1 @ params["wout"].T + params["bout"]


def _init_params(key, vocab_size, emb_dim, hidden):
    ks = jax.random.split(key, 12)
    s = 0.1
    return {
        "embedding": jax.random.normal(ks[0], (vocab_size, emb_dim), jnp.float32),
        # LSTM layer 0
        "wih0": s * jax.random.normal(ks[1], (4 * hidden, emb_dim), jnp.float32),
        "whh0": s * jax.random.normal(ks[2], (4 * hidden, hidden), jnp.float32),
        "bih0": s * jax.random.normal(ks[3], (4 * hidden,), jnp.float32),
        "bhh0": s * jax.random.normal(ks[4], (4 * hidden,), jnp.float32),
        # LSTM layer 1 (num_layers = 2, forward uses hn[1])
        "wih1": s * jax.random.normal(ks[5], (4 * hidden, hidden), jnp.float32),
        "whh1": s * jax.random.normal(ks[6], (4 * hidden, hidden), jnp.float32),
        "bih1": s * jax.random.normal(ks[7], (4 * hidden,), jnp.float32),
        "bhh1": s * jax.random.normal(ks[8], (4 * hidden,), jnp.float32),
        # linear_new: hidden -> len(vocab)
        "wout": s * jax.random.normal(ks[9], (vocab_size, hidden), jnp.float32),
        "bout": s * jax.random.normal(ks[10], (vocab_size,), jnp.float32),
    }


if __name__ == "__main__":
    B, S, E, H, VOCAB = 4, 8, 32, 32, 16

    key = jax.random.PRNGKey(0)
    k_tok, k_par = jax.random.split(key)
    params = _init_params(k_par, VOCAB, E, H)

    inputs = jax.random.randint(k_tok, (B, S), 0, VOCAB, dtype=jnp.int32)
    seq_lengths = jnp.array([8, 5, 3, 6], dtype=jnp.int32)   # packed-seq lengths

    # TODO(synk): emb_dropout / linear_dropout are identity here (deterministic
    # forward); the 'detect' branch (per-token softmax) is not implemented.
    logits = bilstm_p_forward(inputs, seq_lengths, params)
    logits = jax.block_until_ready(logits)

    ref = _reference_forward(inputs, seq_lengths, params)
    assert logits.shape == (B, VOCAB)
    # bf16 MXU operands + bf16 gin storage (f32 accumulation everywhere)
    # -> compare with a bf16-appropriate tolerance
    assert jnp.allclose(logits, ref, atol=3e-2, rtol=3e-2), (
        "mismatch vs reference: max|d|=%f" % float(jnp.max(jnp.abs(logits - ref))))

    print("KERNEL_OK")
</pallas_src>

<mosaic_0001>
module attributes {stable_mosaic.version = 11 : i64} {
  func.func @_input_proj_kernel(%arg0: i32, %arg1: memref<256x128xbf16, #tpu.memory_space<vmem>>, %arg2: memref<128x512xbf16, #tpu.memory_space<vmem>>, %arg3: memref<1x512xf32, #tpu.memory_space<vmem>>, %arg4: memref<256x512xbf16, #tpu.memory_space<vmem>>) attributes {dimension_semantics = [#tpu.dimension_semantics<parallel>], iteration_bounds = array<i64: 1>, scalar_prefetch = 0 : i64, scratch_operands = 0 : i64, tpu.core_type = #tpu.core_type<tc>, window_params = [{transform_indices = @transform_0, window_bounds = array<i64: 256, 128>}, {pipeline_mode = #tpu.pipeline_mode<synchronous>, transform_indices = @transform_1, window_bounds = array<i64: 128, 512>}, {pipeline_mode = #tpu.pipeline_mode<synchronous>, transform_indices = @transform_2, window_bounds = array<i64: 1, 512>}, {transform_indices = @transform_3, window_bounds = array<i64: 256, 512>}]} {
    %c0 = arith.constant 0 : index
    %c0_0 = arith.constant 0 : index
    %0 = vector.load %arg1[%c0, %c0_0] : memref<256x128xbf16, #tpu.memory_space<vmem>>, vector<256x128xbf16>
    %c0_1 = arith.constant 0 : index
    %c0_2 = arith.constant 0 : index
    %1 = vector.load %arg2[%c0_1, %c0_2] : memref<128x512xbf16, #tpu.memory_space<vmem>>, vector<128x512xbf16>
    %cst = arith.constant dense<0.000000e+00> : vector<256x512xf32>
    %2 = tpu.matmul %0, %1, %cst {dimension_numbers = #tpu.dot_dimension_numbers<[1], [0], [0], [1], [0, 0, 1, 1], [], []>} : vector<256x128xbf16>, vector<128x512xbf16>, vector<256x512xf32> -> vector<256x512xf32>
    %c0_3 = arith.constant 0 : index
    %c0_4 = arith.constant 0 : index
    %3 = vector.load %arg3[%c0_3, %c0_4] : memref<1x512xf32, #tpu.memory_space<vmem>>, vector<1x512xf32>
    %4 = vector.broadcast %3 : vector<1x512xf32> to vector<256x512xf32>
    %5 = arith.addf %2, %4 : vector<256x512xf32>
    %6 = arith.truncf %5 : vector<256x512xf32> to vector<256x512xbf16>
    %c0_5 = arith.constant 0 : index
    %c0_6 = arith.constant 0 : index
    %7 = vector.load %arg4[%c0_5, %c0_6] : memref<256x512xbf16, #tpu.memory_space<vmem>>, vector<256x512xbf16>
    tpu.vector_store %arg4[%c0_5, %c0_6], %6 {strides = array<i32>} : memref<256x512xbf16, #tpu.memory_space<vmem>>, vector<256x512xbf16>,
    return
  }
  func.func @transform_0(%arg0: i32) -> (i32, i32) {
    %c0_i32 = arith.constant 0 : i32
    %c0_i32_0 = arith.constant 0 : i32
    return %arg0, %c0_i32 : i32, i32
  }
  func.func @transform_1(%arg0: i32) -> (i32, i32) {
    %c0_i32 = arith.constant 0 : i32
    %c0_i32_0 = arith.constant 0 : i32
    %c0_i32_1 = arith.constant 0 : i32
    return %c0_i32, %c0_i32_0 : i32, i32
  }
  func.func @transform_2(%arg0: i32) -> (i32, i32) {
    %c0_i32 = arith.constant 0 : i32
    %c0_i32_0 = arith.constant 0 : i32
    %c0_i32_1 = arith.constant 0 : i32
    return %c0_i32, %c0_i32_0 : i32, i32
  }
  func.func @transform_3(%arg0: i32) -> (i32, i32) {
    %c0_i32 = arith.constant 0 : i32
    %c0_i32_0 = arith.constant 0 : i32
    return %arg0, %c0_i32 : i32, i32
  }
}

</mosaic_0001>

<llo_original>
// kernel: tpu_custom_call.1
$region0: #{tpu_custom_call.1}
  #allocation0 [shape = 'u32[]', space=smem, size = 0x4, offset = 0x4, fixed_abs, tag = 'smem constant byte address 0x4 - core index']
  #allocation1 [shape = 'u32[144,128]{1,0:T(1,128)}', space=vmem, size = 0x12000, scoped, tag = 'internal scratch']
  %s0 = inlined_call_operand.hbm [shape: bf16[256,128], index: 0, kind: input, shape index: {}]
  %s1 = inlined_call_operand.hbm [shape: bf16[128,512], index: 1, kind: input, shape index: {}]
  %s2 = inlined_call_operand.hbm [shape: f32[1,512], index: 2, kind: input, shape index: {}]
  %s3 = inlined_call_operand.hbm [shape: bf16[256,512], index: 3, kind: output, shape index: {}]
  %s4 = sld [smem:[#allocation0]]
  $region34: #{tpu_custom_call.1} parent=0
    _
  %s6 = ssub.s32 1, %s4
  %s7 = scalar_select 0, %s6, %s4
  $region1: #{tpu_custom_call.1} parent=0
    #allocation2 [shape = 'u8[65536]{0}', space=vmem, size = 0x10000, scoped, tag = 'input window, operand 0, single buffered']
    #allocation3 [shape = 's32[1]{0}', space=sflag, size = 0x4, scoped, tag = 'scoped memory for tpu_custom_call.1']
    #allocation4 [shape = 's32[1]{0}', space=sflag, size = 0x4, scoped, tag = 'scoped memory for tpu_custom_call.1']
    #allocation5 [shape = 'u8[131072]{0}', space=vmem, size = 0x20000, scoped, tag = 'input window, operand 1, single buffered']
    #allocation6 [shape = 's32[1]{0}', space=sflag, size = 0x4, scoped, tag = 'scoped memory for tpu_custom_call.1']
    #allocation7 [shape = 'u8[2048]{0}', space=vmem, size = 0x800, scoped, tag = 'input window, operand 2, single buffered']
    #allocation8 [shape = 'u8[262144]{0}', space=vmem, size = 0x40000, scoped, tag = 'output window, operand 0, single buffered']
    %8 = vsyncpa [#allocation3], 0
    %9 = vsyncpa [#allocation6], 0
    %10 = vsyncpa [#allocation4], 0
    // Predicated region
    $region2: #{tpu_custom_call.1} parent=1 // pred_check
      _
    $region3: #{tpu_custom_call.1} parent=1 // pred_check_branch
      %12 = sbr.rel (0) target = $region5
    $region4: #{tpu_custom_call.1} parent=1 // pred_region
      %s14 = ssub.s32 2048, 2048
      %15 = vsyncadd [#allocation3], %s14
      %s16 = sshll.u32 [#allocation2], 4
      %s17 = int_to_ptr.vmem [resolvable:$true] %s16
      %22 = dma.hbm_to_vmem [thread:$0]  %s0, 2048, %s17, [#allocation3], 64, 64, 4
    $region5: #{tpu_custom_call.1} parent=1 // pred_fallthru
      _
    // Predicated region
    $region6: #{tpu_custom_call.1} parent=1 // pred_check
      _
    $region7: #{tpu_custom_call.1} parent=1 // pred_check_branch
      %24 = sbr.rel (0) target = $region9
    $region8: #{tpu_custom_call.1} parent=1 // pred_region
      %s26 = ssub.s32 4096, 4096
      %27 = vsyncadd [#allocation6], %s26
      %s28 = sshll.u32 [#allocation5], 4
      %s29 = int_to_ptr.vmem [resolvable:$true] %s28
      %34 = dma.hbm_to_vmem [thread:$0]  %s1, 4096, %s29, [#allocation6], 256, 256, 16
    $region9: #{tpu_custom_call.1} parent=1 // pred_fallthru
      _
    // Predicated region
    $region10: #{tpu_custom_call.1} parent=1 // pred_check
      _
    $region11: #{tpu_custom_call.1} parent=1 // pred_check_branch
      %36 = sbr.rel (0) target = $region13
    $region12: #{tpu_custom_call.1} parent=1 // pred_region
      %s38 = ssub.s32 64, 64
      %39 = vsyncadd [#allocation6], %s38
      %s41 = sshll.u32 [#allocation7], 4
      %s42 = int_to_ptr.vmem [resolvable:$true] %s41
      %44 = dma.hbm_to_vmem [thread:$0]  %s2, 64, %s42, [#allocation6]
    $region13: #{tpu_custom_call.1} parent=1 // pred_fallthru
      _
    // Predicated region
    $region14: #{tpu_custom_call.1} parent=1 // pred_check
      _
    $region15: #{tpu_custom_call.1} parent=1 // pred_check_branch
      %46 = sbr.rel (0) target = $region17
    $region16: #{tpu_custom_call.1} parent=1 // pred_region
      %47 = dma.done [#allocation3], 2048
    $region17: #{tpu_custom_call.1} parent=1 // pred_fallthru
      _
    // Predicated region
    $region18: #{tpu_custom_call.1} parent=1 // pred_check
      _
    $region19: #{tpu_custom_call.1} parent=1 // pred_check_branch
      %49 = sbr.rel (0) target = $region21
    $region20: #{tpu_custom_call.1} parent=1 // pred_region
      %50 = dma.done [#allocation6], 4096
    $region21: #{tpu_custom_call.1} parent=1 // pred_fallthru
      _
    // Predicated region
    $region22: #{tpu_custom_call.1} parent=1 // pred_check
      _
    $region23: #{tpu_custom_call.1} parent=1 // pred_check_branch
      %52 = sbr.rel (0) target = $region25
    $region24: #{tpu_custom_call.1} parent=1 // pred_region
      %53 = dma.done [#allocation6], 64
    $region25: #{tpu_custom_call.1} parent=1 // pred_fallthru
      _
    %v55 = vld [vmem:[#allocation2] sm:$0xf]
    %v56 = vld [vmem:[#allocation2 + $0x4] sm:$0xf]
    %v57 = vld [vmem:[#allocation2 + $0x8] sm:$0xf]
    %v58 = vld [vmem:[#allocation2 + $0xc] sm:$0xf]
    %v59 = vld [vmem:[#allocation2 + $0x10] sm:$0xf]
    %v60 = vld [vmem:[#allocation2 + $0x14] sm:$0xf]
    %v61 = vld [vmem:[#allocation2 + $0x18] sm:$0xf]
    %v62 = vld [vmem:[#allocation2 + $0x1c] sm:$0xf]
    %v63 = vld [vmem:[#allocation2 + $0x20] sm:$0xf]
    %v64 = vld [vmem:[#allocation2 + $0x24] sm:$0xf]
    %v65 = vld [vmem:[#allocation2 + $0x28] sm:$0xf]
    %v66 = vld [vmem:[#allocation2 + $0x2c] sm:$0xf]
    %v67 = vld [vmem:[#allocation2 + $0x30] sm:$0xf]
    %v68 = vld [vmem:[#allocation2 + $0x34] sm:$0xf]
    %v69 = vld [vmem:[#allocation2 + $0x38] sm:$0xf]
    %v70 = vld [vmem:[#allocation2 + $0x3c] sm:$0xf]
    %v71 = vld [vmem:[#allocation2 + $0x40] sm:$0xf]
    %v72 = vld [vmem:[#allocation2 + $0x44] sm:$0xf]
    %v73 = vld [vmem:[#allocation2 + $0x48] sm:$0xf]
    %v74 = vld [vmem:[#allocation2 + $0x4c] sm:$0xf]
    %v75 = vld [vmem:[#allocation2 + $0x50] sm:$0xf]
    %v76 = vld [vmem:[#allocation2 + $0x54] sm:$0xf]
    %v77 = vld [vmem:[#allocation2 + $0x58] sm:$0xf]
    %v78 = vld [vmem:[#allocation2 + $0x5c] sm:$0xf]
    %v79 = vld [vmem:[#allocation2 + $0x60] sm:$0xf]
    %v80 = vld [vmem:[#allocation2 + $0x64] sm:$0xf]
    %v81 = vld [vmem:[#allocation2 + $0x68] sm:$0xf]
    %v82 = vld [vmem:[#allocation2 + $0x6c] sm:$0xf]
    %v83 = vld [vmem:[#allocation2 + $0x70] sm:$0xf]
    %v84 = vld [vmem:[#allocation2 + $0x74] sm:$0xf]
    %v85 = vld [vmem:[#allocation2 + $0x78] sm:$0xf]
    %v86 = vld [vmem:[#allocation2 + $0x7c] sm:$0xf]
    %v87 = vld [vmem:[#allocation5] sm:$0xff]
    %v88 = vld [vmem:[#allocation5 + $0x8] sm:$0xff]
    %v89 = vld [vmem:[#allocation5 + $0x10] sm:$0xff]
    %v90 = vld [vmem:[#allocation5 + $0x18] sm:$0xff]
    %v91 = vld [vmem:[#allocation5 + $0x20] sm:$0xff]
    %v92 = vld [vmem:[#allocation5 + $0x28] sm:$0xff]
    %v93 = vld [vmem:[#allocation5 + $0x30] sm:$0xff]
    %v94 = vld [vmem:[#allocation5 + $0x38] sm:$0xff]
    %v95 = vld [vmem:[#allocation5 + $0x40] sm:$0xff]
    %v96 = vld [vmem:[#allocation5 + $0x48] sm:$0xff]
    %v97 = vld [vmem:[#allocation5 + $0x50] sm:$0xff]
    %v98 = vld [vmem:[#allocation5 + $0x58] sm:$0xff]
    %v99 = vld [vmem:[#allocation5 + $0x60] sm:$0xff]
    %v100 = vld [vmem:[#allocation5 + $0x68] sm:$0xff]
    %v101 = vld [vmem:[#allocation5 + $0x70] sm:$0xff]
    %v102 = vld [vmem:[#allocation5 + $0x78] sm:$0xff]
    %v103 = vld [vmem:[#allocation5 + $0x80] sm:$0xff]
    %v104 = vld [vmem:[#allocation5 + $0x88] sm:$0xff]
    %v105 = vld [vmem:[#allocation5 + $0x90] sm:$0xff]
    %v106 = vld [vmem:[#allocation5 + $0x98] sm:$0xff]
    %v107 = vld [vmem:[#allocation5 + $0xa0] sm:$0xff]
    %v108 = vld [vmem:[#allocation5 + $0xa8] sm:$0xff]
    %v109 = vld [vmem:[#allocation5 + $0xb0] sm:$0xff]
    %v110 = vld [vmem:[#allocation5 + $0xb8] sm:$0xff]
    %v111 = vld [vmem:[#allocation5 + $0xc0] sm:$0xff]
    %v112 = vld [vmem:[#allocation5 + $0xc8] sm:$0xff]
    %v113 = vld [vmem:[#allocation5 + $0xd0] sm:$0xff]
    %v114 = vld [vmem:[#allocation5 + $0xd8] sm:$0xff]
    %v115 = vld [vmem:[#allocation5 + $0xe0] sm:$0xff]
    %v116 = vld [vmem:[#allocation5 + $0xe8] sm:$0xff]
    %v117 = vld [vmem:[#allocation5 + $0xf0] sm:$0xff]
    %v118 = vld [vmem:[#allocation5 + $0xf8] sm:$0xff]
    %v119 = vld [vmem:[#allocation7] sm:$0xf]
    %v121 = vlaneseq
    %v122 = vshrl.u32 %v121, 7
    %v123 = vsub.s32 0, %v122
    %v124 = vrot.slane %v119, %v123
    %v125 = vlaneseq
    %v126 = vshrl.u32 %v125, 7
    %v127 = vsub.s32 1, %v126
    %v128 = vrot.slane %v119, %v127
    %v129 = vlaneseq
    %v130 = vshrl.u32 %v129, 7
    %v131 = vsub.s32 2, %v130
    %v132 = vrot.slane %v119, %v131
    %v133 = vlaneseq
    %v134 = vshrl.u32 %v133, 7
    %v135 = vsub.s32 3, %v134
    %v136 = vrot.slane %v119, %v135
    %v173 = vunpack.c.l.b16 %v55
    %v174 = vunpack.c.l.b16 %v56
    %v175 = vunpack.c.l.b16 %v57
    %v176 = vunpack.c.l.b16 %v58
    %v177 = vunpack.c.l.b16 %v59
    %v178 = vunpack.c.l.b16 %v60
    %v179 = vunpack.c.l.b16 %v61
    %v180 = vunpack.c.l.b16 %v62
    %v181 = vunpack.c.l.b16 %v63
    %v182 = vunpack.c.l.b16 %v64
    %v183 = vunpack.c.l.b16 %v65
    %v184 = vunpack.c.l.b16 %v66
    %v185 = vunpack.c.l.b16 %v67
    %v186 = vunpack.c.l.b16 %v68
    %v187 = vunpack.c.l.b16 %v69
    %v188 = vunpack.c.l.b16 %v70
    %v189 = vunpack.c.l.b16 %v71
    %v190 = vunpack.c.l.b16 %v72
    %v191 = vunpack.c.l.b16 %v73
    %v192 = vunpack.c.l.b16 %v74
    %v193 = vunpack.c.l.b16 %v75
    %v194 = vunpack.c.l.b16 %v76
    %v195 = vunpack.c.l.b16 %v77
    %v196 = vunpack.c.l.b16 %v78
    %v197 = vunpack.c.l.b16 %v79
    %v198 = vunpack.c.l.b16 %v80
    %v199 = vunpack.c.l.b16 %v81
    %v200 = vunpack.c.l.b16 %v82
    %v201 = vunpack.c.l.b16 %v83
    %v202 = vunpack.c.l.b16 %v84
    %v203 = vunpack.c.l.b16 %v85
    %v204 = vunpack.c.l.b16 %v86
    %v205 = vpack.c.b16 %v174, %v173
    %v206 = vpack.c.b16 %v176, %v175
    %v207 = vpack.c.b16 %v178, %v177
    %v208 = vpack.c.b16 %v180, %v179
    %v209 = vpack.c.b16 %v182, %v181
    %v210 = vpack.c.b16 %v184, %v183
    %v211 = vpack.c.b16 %v186, %v185
    %v212 = vpack.c.b16 %v188, %v187
    %v213 = vpack.c.b16 %v190, %v189
    %v214 = vpack.c.b16 %v192, %v191
    %v215 = vpack.c.b16 %v194, %v193
    %v216 = vpack.c.b16 %v196, %v195
    %v217 = vpack.c.b16 %v198, %v197
    %v218 = vpack.c.b16 %v200, %v199
    %v219 = vpack.c.b16 %v202, %v201
    %v220 = vpack.c.b16 %v204, %v203
    %v269 = vunpack.c.l.b16 %v87
    %v270 = vunpack.c.h.b16 %v87
    %v271 = vunpack.c.l.b16 %v88
    %v272 = vunpack.c.h.b16 %v88
    %v273 = vunpack.c.l.b16 %v89
    %v274 = vunpack.c.h.b16 %v89
    %v275 = vunpack.c.l.b16 %v90
    %v276 = vunpack.c.h.b16 %v90
    %v277 = vunpack.c.l.b16 %v91
    %v278 = vunpack.c.h.b16 %v91
    %v279 = vunpack.c.l.b16 %v92
    %v280 = vunpack.c.h.b16 %v92
    %v281 = vunpack.c.l.b16 %v93
    %v282 = vunpack.c.h.b16 %v93
    %v283 = vunpack.c.l.b16 %v94
    %v284 = vunpack.c.h.b16 %v94
    %v285 = vunpack.c.l.b16 %v95
    %v286 = vunpack.c.h.b16 %v95
    %v287 = vunpack.c.l.b16 %v96
    %v288 = vunpack.c.h.b16 %v96
    %v289 = vunpack.c.l.b16 %v97
    %v290 = vunpack.c.h.b16 %v97
    %v291 = vunpack.c.l.b16 %v98
    %v292 = vunpack.c.h.b16 %v98
    %v293 = vunpack.c.l.b16 %v99
    %v294 = vunpack.c.h.b16 %v99
    %v295 = vunpack.c.l.b16 %v100
    %v296 = vunpack.c.h.b16 %v100
    %v297 = vunpack.c.l.b16 %v101
    %v298 = vunpack.c.h.b16 %v101
    %v299 = vunpack.c.l.b16 %v102
    %v300 = vunpack.c.h.b16 %v102
    %v301 = vunpack.c.l.b16 %v103
    %v302 = vunpack.c.h.b16 %v103
    %v303 = vunpack.c.l.b16 %v104
    %v304 = vunpack.c.h.b16 %v104
    %v305 = vunpack.c.l.b16 %v105
    %v306 = vunpack.c.h.b16 %v105
    %v307 = vunpack.c.l.b16 %v106
    %v308 = vunpack.c.h.b16 %v106
    %v309 = vunpack.c.l.b16 %v107
    %v310 = vunpack.c.h.b16 %v107
    %v311 = vunpack.c.l.b16 %v108
    %v312 = vunpack.c.h.b16 %v108
    %v313 = vunpack.c.l.b16 %v109
    %v314 = vunpack.c.h.b16 %v109
    %v315 = vunpack.c.l.b16 %v110
    %v316 = vunpack.c.h.b16 %v110
    %v317 = vunpack.c.l.b16 %v111
    %v318 = vunpack.c.h.b16 %v111
    %v319 = vunpack.c.l.b16 %v112
    %v320 = vunpack.c.h.b16 %v112
    %v321 = vunpack.c.l.b16 %v113
    %v322 = vunpack.c.h.b16 %v113
    %v323 = vunpack.c.l.b16 %v114
    %v324 = vunpack.c.h.b16 %v114
    %v325 = vunpack.c.l.b16 %v115
    %v326 = vunpack.c.h.b16 %v115
    %v327 = vunpack.c.l.b16 %v116
    %v328 = vunpack.c.h.b16 %v116
    %v329 = vunpack.c.l.b16 %v117
    %v330 = vunpack.c.h.b16 %v117
    %v331 = vunpack.c.l.b16 %v118
    %v332 = vunpack.c.h.b16 %v118
    %v333 = vpack.c.b16 %v273, %v269
    %v334 = vpack.c.b16 %v274, %v270
    %v335 = vpack.c.b16 %v275, %v271
    %v336 = vpack.c.b16 %v276, %v272
    %v337 = vpack.c.b16 %v281, %v277
    %v338 = vpack.c.b16 %v282, %v278
    %v339 = vpack.c.b16 %v283, %v279
    %v340 = vpack.c.b16 %v284, %v280
    %v341 = vpack.c.b16 %v289, %v285
    %v342 = vpack.c.b16 %v290, %v286
    %v343 = vpack.c.b16 %v291, %v287
    %v344 = vpack.c.b16 %v292, %v288
    %v345 = vpack.c.b16 %v297, %v293
    %v346 = vpack.c.b16 %v298, %v294
    %v347 = vpack.c.b16 %v299, %v295
    %v348 = vpack.c.b16 %v300, %v296
    %v349 = vpack.c.b16 %v305, %v301
    %v350 = vpack.c.b16 %v306, %v302
    %v351 = vpack.c.b16 %v307, %v303
    %v352 = vpack.c.b16 %v308, %v304
    %v353 = vpack.c.b16 %v313, %v309
    %v354 = vpack.c.b16 %v314, %v310
    %v355 = vpack.c.b16 %v315, %v311
    %v356 = vpack.c.b16 %v316, %v312
    %v357 = vpack.c.b16 %v321, %v317
    %v358 = vpack.c.b16 %v322, %v318
    %v359 = vpack.c.b16 %v323, %v319
    %v360 = vpack.c.b16 %v324, %v320
    %v361 = vpack.c.b16 %v329, %v325
    %v362 = vpack.c.b16 %v330, %v326
    %v363 = vpack.c.b16 %v331, %v327
    %v364 = vpack.c.b16 %v332, %v328
    %397 = vmatprep.subr.bf16.mxu0 %v362
    %398 = vmatpush1.bf16.msra.mxu0 %v361
    %399 = vmatprep.subr.bf16.mxu0 %v358
    %400 = vmatpush1.bf16.msra.mxu0 %v357
    %401 = vmatprep.subr.bf16.mxu0 %v354
    %402 = vmatpush1.bf16.msra.mxu0 %v353
    %403 = vmatprep.subr.bf16.mxu0 %v350
    %404 = vmatpush1.bf16.msra.mxu0 %v349
    %405 = vmatprep.subr.bf16.mxu0 %v346
    %406 = vmatpush1.bf16.msra.mxu0 %v345
    %407 = vmatprep.subr.bf16.mxu0 %v342
    %408 = vmatpush1.bf16.msra.mxu0 %v341
    %409 = vmatprep.subr.bf16.mxu0 %v338
    %410 = vmatpush1.bf16.msra.mxu0 %v337
    %411 = vmatprep.subr.bf16.mxu0 %v334
    %412 = vmatpush1.bf16.msra.mxu0 %v333
    %413 = vmatprep.subr.bf16.mxu0 0
    %414 = vmatpush2.bf16.msra.mxu0 0
    %415 = vmatprep.subr.bf16.mxu0 0
    %416 = vmatpush2.bf16.msra.mxu0 0
    %417 = vmatprep.subr.bf16.mxu0 0
    %418 = vmatpush2.bf16.msra.mxu0 0
    %419 = vmatprep.subr.bf16.mxu0 0
    %420 = vmatpush2.bf16.msra.mxu0 0
    %421 = vmatprep.subr.bf16.mxu0 0
    %422 = vmatpush2.bf16.msra.mxu0 0
    %423 = vmatprep.subr.bf16.mxu0 0
    %424 = vmatpush2.bf16.msra.mxu0 0
    %425 = vmatprep.subr.bf16.mxu0 0
    %426 = vmatpush2.bf16.msra.mxu0 0
    %427 = vmatprep.subr.bf16.mxu0 0
    %428 = vmatpush2.bf16.msra.mxu0 0
    %429 = vmatprep.mubr.bf16.mxu0 0
    %430 = vmatmul.mubr.bf16.gmra.mxu0 %v205
    %v431 = vpop.f32.mrf.mxu0
    %v432 = vadd.f32 %v124, %v431
    %v433 = vpop.f32.mrf.mxu0
    %v434 = vadd.f32 %v128, %v433
    %v435 = vpop.f32.mrf.mxu0
    %v436 = vadd.f32 %v124, %v435
    %v437 = vpop.f32.mrf.mxu0
    %v438 = vadd.f32 %v128, %v437
    %439 = vmatprep.mubr.bf16.mxu0 0
    %440 = vmatmul.mubr.bf16.gmra.mxu0 %v206
    %v441 = vpop.f32.mrf.mxu0
    %v442 = vadd.f32 %v124, %v441
    %v443 = vpop.f32.mrf.mxu0
    %v444 = vadd.f32 %v128, %v443
    %v445 = vpop.f32.mrf.mxu0
    %v446 = vadd.f32 %v124, %v445
    %v447 = vpop.f32.mrf.mxu0
    %v448 = vadd.f32 %v128, %v447
    %449 = vmatprep.mubr.bf16.mxu0 0
    %450 = vmatmul.mubr.bf16.gmra.mxu0 %v207
    %v451 = vpop.f32.mrf.mxu0
    %v452 = vadd.f32 %v124, %v451
    %v453 = vpop.f32.mrf.mxu0
    %v454 = vadd.f32 %v128, %v453
    %v455 = vpop.f32.mrf.mxu0
    %v456 = vadd.f32 %v124, %v455
    %v457 = vpop.f32.mrf.mxu0
    %v458 = vadd.f32 %v128, %v457
    %459 = vmatprep.mubr.bf16.mxu0 0
    %460 = vmatmul.mubr.bf16.gmra.mxu0 %v208
    %v461 = vpop.f32.mrf.mxu0
    %v462 = vadd.f32 %v124, %v461
    %v463 = vpop.f32.mrf.mxu0
    %v464 = vadd.f32 %v128, %v463
    %v465 = vpop.f32.mrf.mxu0
    %v466 = vadd.f32 %v124, %v465
    %v467 = vpop.f32.mrf.mxu0
    %v468 = vadd.f32 %v128, %v467
    %469 = vmatprep.mubr.bf16.mxu0 0
    %470 = vmatmul.mubr.bf16.gmra.mxu0 %v209
    %v471 = vpop.f32.mrf.mxu0
    %v472 = vadd.f32 %v124, %v471
    %v473 = vpop.f32.mrf.mxu0
    %v474 = vadd.f32 %v128, %v473
    %v475 = vpop.f32.mrf.mxu0
    %v476 = vadd.f32 %v124, %v475
    %v477 = vpop.f32.mrf.mxu0
    %v478 = vadd.f32 %v128, %v477
    %479 = vmatprep.mubr.bf16.mxu0 0
    %480 = vmatmul.mubr.bf16.gmra.mxu0 %v210
    %v481 = vpop.f32.mrf.mxu0
    %v482 = vadd.f32 %v124, %v481
    %v483 = vpop.f32.mrf.mxu0
    %v484 = vadd.f32 %v128, %v483
    %v485 = vpop.f32.mrf.mxu0
    %v486 = vadd.f32 %v124, %v485
    %v487 = vpop.f32.mrf.mxu0
    %v488 = vadd.f32 %v128, %v487
    %489 = vmatprep.mubr.bf16.mxu0 0
    %490 = vmatmul.mubr.bf16.gmra.mxu0 %v211
    %v491 = vpop.f32.mrf.mxu0
    %v492 = vadd.f32 %v124, %v491
    %v493 = vpop.f32.mrf.mxu0
    %v494 = vadd.f32 %v128, %v493
    %v495 = vpop.f32.mrf.mxu0
    %v496 = vadd.f32 %v124, %v495
    %v497 = vpop.f32.mrf.mxu0
    %v498 = vadd.f32 %v128, %v497
    %499 = vmatprep.mubr.bf16.mxu0 0
    %500 = vmatmul.mubr.bf16.gmra.mxu0 %v212
    %v501 = vpop.f32.mrf.mxu0
    %v502 = vadd.f32 %v124, %v501
    %v503 = vpop.f32.mrf.mxu0
    %v504 = vadd.f32 %v128, %v503
    %v505 = vpop.f32.mrf.mxu0
    %v506 = vadd.f32 %v124, %v505
    %v507 = vpop.f32.mrf.mxu0
    %v508 = vadd.f32 %v128, %v507
    %509 = vmatprep.mubr.bf16.mxu0 0
    %510 = vmatmul.mubr.bf16.gmra.mxu0 %v213
    %v511 = vpop.f32.mrf.mxu0
    %v512 = vadd.f32 %v124, %v511
    %v513 = vpop.f32.mrf.mxu0
    %v514 = vadd.f32 %v128, %v513
    %v515 = vpop.f32.mrf.mxu0
    %v516 = vadd.f32 %v124, %v515
    %v517 = vpop.f32.mrf.mxu0
    %v518 = vadd.f32 %v128, %v517
    %519 = vmatprep.mubr.bf16.mxu0 0
    %520 = vmatmul.mubr.bf16.gmra.mxu0 %v214
    %v521 = vpop.f32.mrf.mxu0
    %v522 = vadd.f32 %v124, %v521
    %v523 = vpop.f32.mrf.mxu0
    %v524 = vadd.f32 %v128, %v523
    %v525 = vpop.f32.mrf.mxu0
    %v526 = vadd.f32 %v124, %v525
    %v527 = vpop.f32.mrf.mxu0
    %v528 = vadd.f32 %v128, %v527
    %529 = vmatprep.mubr.bf16.mxu0 0
    %530 = vmatmul.mubr.bf16.gmra.mxu0 %v215
    %v531 = vpop.f32.mrf.mxu0
    %v532 = vadd.f32 %v124, %v531
    %v533 = vpop.f32.mrf.mxu0
    %v534 = vadd.f32 %v128, %v533
    %v535 = vpop.f32.mrf.mxu0
    %v536 = vadd.f32 %v124, %v535
    %v537 = vpop.f32.mrf.mxu0
    %v538 = vadd.f32 %v128, %v537
    %539 = vmatprep.mubr.bf16.mxu0 0
    %540 = vmatmul.mubr.bf16.gmra.mxu0 %v216
    %v541 = vpop.f32.mrf.mxu0
    %v542 = vadd.f32 %v124, %v541
    %v543 = vpop.f32.mrf.mxu0
    %v544 = vadd.f32 %v128, %v543
    %v545 = vpop.f32.mrf.mxu0
    %v546 = vadd.f32 %v124, %v545
    %v547 = vpop.f32.mrf.mxu0
    %v548 = vadd.f32 %v128, %v547
    %549 = vmatprep.mubr.bf16.mxu0 0
    %550 = vmatmul.mubr.bf16.gmra.mxu0 %v217
    %v551 = vpop.f32.mrf.mxu0
    %v552 = vadd.f32 %v124, %v551
    %v553 = vpop.f32.mrf.mxu0
    %v554 = vadd.f32 %v128, %v553
    %v555 = vpop.f32.mrf.mxu0
    %v556 = vadd.f32 %v124, %v555
    %v557 = vpop.f32.mrf.mxu0
    %v558 = vadd.f32 %v128, %v557
    %559 = vmatprep.mubr.bf16.mxu0 0
    %560 = vmatmul.mubr.bf16.gmra.mxu0 %v218
    %v561 = vpop.f32.mrf.mxu0
    %v562 = vadd.f32 %v124, %v561
    %v563 = vpop.f32.mrf.mxu0
    %v564 = vadd.f32 %v128, %v563
    %v565 = vpop.f32.mrf.mxu0
    %v566 = vadd.f32 %v124, %v565
    %v567 = vpop.f32.mrf.mxu0
    %v568 = vadd.f32 %v128, %v567
    %569 = vmatprep.mubr.bf16.mxu0 0
    %570 = vmatmul.mubr.bf16.gmra.mxu0 %v219
    %v571 = vpop.f32.mrf.mxu0
    %v572 = vadd.f32 %v124, %v571
    %v573 = vpop.f32.mrf.mxu0
    %v574 = vadd.f32 %v128, %v573
    %v575 = vpop.f32.mrf.mxu0
    %v576 = vadd.f32 %v124, %v575
    %v577 = vpop.f32.mrf.mxu0
    %v578 = vadd.f32 %v128, %v577
    %579 = vmatprep.mubr.bf16.mxu0 0
    %580 = vmatmul.mubr.bf16.gmra.mxu0 %v220
    %v581 = vpop.f32.mrf.mxu0
    %v582 = vadd.f32 %v124, %v581
    %v583 = vpop.f32.mrf.mxu0
    %v584 = vadd.f32 %v128, %v583
    %v585 = vpop.f32.mrf.mxu0
    %v586 = vadd.f32 %v124, %v585
    %v587 = vpop.f32.mrf.mxu0
    %v588 = vadd.f32 %v128, %v587
    %589 = vdwg.mxu0
    %590 = vmatprep.subr.bf16.mxu0 %v364
    %591 = vmatpush1.bf16.msra.mxu0 %v363
    %592 = vmatprep.subr.bf16.mxu0 %v360
    %593 = vmatpush1.bf16.msra.mxu0 %v359
    %594 = vmatprep.subr.bf16.mxu0 %v356
    %595 = vmatpush1.bf16.msra.mxu0 %v355
    %596 = vmatprep.subr.bf16.mxu0 %v352
    %597 = vmatpush1.bf16.msra.mxu0 %v351
    %598 = vmatprep.subr.bf16.mxu0 %v348
    %599 = vmatpush1.bf16.msra.mxu0 %v347
    %600 = vmatprep.subr.bf16.mxu0 %v344
    %601 = vmatpush1.bf16.msra.mxu0 %v343
    %602 = vmatprep.subr.bf16.mxu0 %v340
    %603 = vmatpush1.bf16.msra.mxu0 %v339
    %604 = vmatprep.subr.bf16.mxu0 %v336
    %605 = vmatpush1.bf16.msra.mxu0 %v335
    %606 = vmatprep.subr.bf16.mxu0 0
    %607 = vmatpush2.bf16.msra.mxu0 0
    %608 = vmatprep.subr.bf16.mxu0 0
    %609 = vmatpush2.bf16.msra.mxu0 0
    %610 = vmatprep.subr.bf16.mxu0 0
    %611 = vmatpush2.bf16.msra.mxu0 0
    %612 = vmatprep.subr.bf16.mxu0 0
    %613 = vmatpush2.bf16.msra.mxu0 0
    %614 = vmatprep.subr.bf16.mxu0 0
    %615 = vmatpush2.bf16.msra.mxu0 0
    %616 = vmatprep.subr.bf16.mxu0 0
    %617 = vmatpush2.bf16.msra.mxu0 0
    %618 = vmatprep.subr.bf16.mxu0 0
    %619 = vmatpush2.bf16.msra.mxu0 0
    %620 = vmatprep.subr.bf16.mxu0 0
    %621 = vmatpush2.bf16.msra.mxu0 0
    %622 = vmatprep.mubr.bf16.mxu0 0
    %623 = vmatmul.mubr.bf16.gmra.mxu0 %v205
    %v624 = vpop.f32.mrf.mxu0
    %v625 = vadd.f32 %v132, %v624
    %v626 = vpop.f32.mrf.mxu0
    %v627 = vadd.f32 %v136, %v626
    %v628 = vpop.f32.mrf.mxu0
    %v629 = vadd.f32 %v132, %v628
    %v630 = vpop.f32.mrf.mxu0
    %v631 = vadd.f32 %v136, %v630
    %632 = vmatprep.mubr.bf16.mxu0 0
    %633 = vmatmul.mubr.bf16.gmra.mxu0 %v206
    %v634 = vpop.f32.mrf.mxu0
    %v635 = vadd.f32 %v132, %v634
    %v636 = vpop.f32.mrf.mxu0
    %v637 = vadd.f32 %v136, %v636
    %v638 = vpop.f32.mrf.mxu0
    %v639 = vadd.f32 %v132, %v638
    %v640 = vpop.f32.mrf.mxu0
    %v641 = vadd.f32 %v136, %v640
    %642 = vmatprep.mubr.bf16.mxu0 0
    %643 = vmatmul.mubr.bf16.gmra.mxu0 %v207
    %v644 = vpop.f32.mrf.mxu0
    %v645 = vadd.f32 %v132, %v644
    %v646 = vpop.f32.mrf.mxu0
    %v647 = vadd.f32 %v136, %v646
    %v648 = vpop.f32.mrf.mxu0
    %v649 = vadd.f32 %v132, %v648
    %v650 = vpop.f32.mrf.mxu0
    %v651 = vadd.f32 %v136, %v650
    %652 = vmatprep.mubr.bf16.mxu0 0
    %653 = vmatmul.mubr.bf16.gmra.mxu0 %v208
    %v654 = vpop.f32.mrf.mxu0
    %v655 = vadd.f32 %v132, %v654
    %v656 = vpop.f32.mrf.mxu0
    %v657 = vadd.f32 %v136, %v656
    %v658 = vpop.f32.mrf.mxu0
    %v659 = vadd.f32 %v132, %v658
    %v660 = vpop.f32.mrf.mxu0
    %v661 = vadd.f32 %v136, %v660
    %662 = vmatprep.mubr.bf16.mxu0 0
    %663 = vmatmul.mubr.bf16.gmra.mxu0 %v209
    %v664 = vpop.f32.mrf.mxu0
    %v665 = vadd.f32 %v132, %v664
    %v666 = vpop.f32.mrf.mxu0
    %v667 = vadd.f32 %v136, %v666
    %v668 = vpop.f32.mrf.mxu0
    %v669 = vadd.f32 %v132, %v668
    %v670 = vpop.f32.mrf.mxu0
    %v671 = vadd.f32 %v136, %v670
    %672 = vmatprep.mubr.bf16.mxu0 0
    %673 = vmatmul.mubr.bf16.gmra.mxu0 %v210
    %v674 = vpop.f32.mrf.mxu0
    %v675 = vadd.f32 %v132, %v674
    %v676 = vpop.f32.mrf.mxu0
    %v677 = vadd.f32 %v136, %v676
    %v678 = vpop.f32.mrf.mxu0
    %v679 = vadd.f32 %v132, %v678
    %v680 = vpop.f32.mrf.mxu0
    %v681 = vadd.f32 %v136, %v680
    %682 = vmatprep.mubr.bf16.mxu0 0
    %683 = vmatmul.mubr.bf16.gmra.mxu0 %v211
    %v684 = vpop.f32.mrf.mxu0
    %v685 = vadd.f32 %v132, %v684
    %v686 = vpop.f32.mrf.mxu0
    %v687 = vadd.f32 %v136, %v686
    %v688 = vpop.f32.mrf.mxu0
    %v689 = vadd.f32 %v132, %v688
    %v690 = vpop.f32.mrf.mxu0
    %v691 = vadd.f32 %v136, %v690
    %692 = vmatprep.mubr.bf16.mxu0 0
    %693 = vmatmul.mubr.bf16.gmra.mxu0 %v212
    %v694 = vpop.f32.mrf.mxu0
    %v695 = vadd.f32 %v132, %v694
    %v696 = vpop.f32.mrf.mxu0
    %v697 = vadd.f32 %v136, %v696
    %v698 = vpop.f32.mrf.mxu0
    %v699 = vadd.f32 %v132, %v698
    %v700 = vpop.f32.mrf.mxu0
    %v701 = vadd.f32 %v136, %v700
    %702 = vmatprep.mubr.bf16.mxu0 0
    %703 = vmatmul.mubr.bf16.gmra.mxu0 %v213
    %v704 = vpop.f32.mrf.mxu0
    %v705 = vadd.f32 %v132, %v704
    %v706 = vpop.f32.mrf.mxu0
    %v707 = vadd.f32 %v136, %v706
    %v708 = vpop.f32.mrf.mxu0
    %v709 = vadd.f32 %v132, %v708
    %v710 = vpop.f32.mrf.mxu0
    %v711 = vadd.f32 %v136, %v710
    %712 = vmatprep.mubr.bf16.mxu0 0
    %713 = vmatmul.mubr.bf16.gmra.mxu0 %v214
    %v714 = vpop.f32.mrf.mxu0
    %v715 = vadd.f32 %v132, %v714
    %v716 = vpop.f32.mrf.mxu0
    %v717 = vadd.f32 %v136, %v716
    %v718 = vpop.f32.mrf.mxu0
    %v719 = vadd.f32 %v132, %v718
    %v720 = vpop.f32.mrf.mxu0
    %v721 = vadd.f32 %v136, %v720
    %722 = vmatprep.mubr.bf16.mxu0 0
    %723 = vmatmul.mubr.bf16.gmra.mxu0 %v215
    %v724 = vpop.f32.mrf.mxu0
    %v725 = vadd.f32 %v132, %v724
    %v726 = vpop.f32.mrf.mxu0
    %v727 = vadd.f32 %v136, %v726
    %v728 = vpop.f32.mrf.mxu0
    %v729 = vadd.f32 %v132, %v728
    %v730 = vpop.f32.mrf.mxu0
    %v731 = vadd.f32 %v136, %v730
    %732 = vmatprep.mubr.bf16.mxu0 0
    %733 = vmatmul.mubr.bf16.gmra.mxu0 %v216
    %v734 = vpop.f32.mrf.mxu0
    %v735 = vadd.f32 %v132, %v734
    %v736 = vpop.f32.mrf.mxu0
    %v737 = vadd.f32 %v136, %v736
    %v738 = vpop.f32.mrf.mxu0
    %v739 = vadd.f32 %v132, %v738
    %v740 = vpop.f32.mrf.mxu0
    %v741 = vadd.f32 %v136, %v740
    %742 = vmatprep.mubr.bf16.mxu0 0
    %743 = vmatmul.mubr.bf16.gmra.mxu0 %v217
    %v744 = vpop.f32.mrf.mxu0
    %v745 = vadd.f32 %v132, %v744
    %v746 = vpop.f32.mrf.mxu0
    %v747 = vadd.f32 %v136, %v746
    %v748 = vpop.f32.mrf.mxu0
    %v749 = vadd.f32 %v132, %v748
    %v750 = vpop.f32.mrf.mxu0
    %v751 = vadd.f32 %v136, %v750
    %752 = vmatprep.mubr.bf16.mxu0 0
    %753 = vmatmul.mubr.bf16.gmra.mxu0 %v218
    %v754 = vpop.f32.mrf.mxu0
    %v755 = vadd.f32 %v132, %v754
    %v756 = vpop.f32.mrf.mxu0
    %v757 = vadd.f32 %v136, %v756
    %v758 = vpop.f32.mrf.mxu0
    %v759 = vadd.f32 %v132, %v758
    %v760 = vpop.f32.mrf.mxu0
    %v761 = vadd.f32 %v136, %v760
    %762 = vmatprep.mubr.bf16.mxu0 0
    %763 = vmatmul.mubr.bf16.gmra.mxu0 %v219
    %v764 = vpop.f32.mrf.mxu0
    %v765 = vadd.f32 %v132, %v764
    %v766 = vpop.f32.mrf.mxu0
    %v767 = vadd.f32 %v136, %v766
    %v768 = vpop.f32.mrf.mxu0
    %v769 = vadd.f32 %v132, %v768
    %v770 = vpop.f32.mrf.mxu0
    %v771 = vadd.f32 %v136, %v770
    %772 = vmatprep.mubr.bf16.mxu0 0
    %773 = vmatmul.mubr.bf16.gmra.mxu0 %v220
    %v774 = vpop.f32.mrf.mxu0
    %v775 = vadd.f32 %v132, %v774
    %v776 = vpop.f32.mrf.mxu0
    %v777 = vadd.f32 %v136, %v776
    %v778 = vpop.f32.mrf.mxu0
    %v779 = vadd.f32 %v132, %v778
    %v780 = vpop.f32.mrf.mxu0
    %v781 = vadd.f32 %v136, %v780
    %782 = vdwg.mxu0
    %v783 = vpack.c.bf16 %v436, %v432
    %v784 = vpack.c.bf16 %v438, %v434
    %v785 = vpack.c.bf16 %v629, %v625
    %v786 = vpack.c.bf16 %v631, %v627
    %v787 = vpack.c.bf16 %v446, %v442
    %v788 = vpack.c.bf16 %v448, %v444
    %v789 = vpack.c.bf16 %v639, %v635
    %v790 = vpack.c.bf16 %v641, %v637
    %v791 = vpack.c.bf16 %v456, %v452
    %v792 = vpack.c.bf16 %v458, %v454
    %v793 = vpack.c.bf16 %v649, %v645
    %v794 = vpack.c.bf16 %v651, %v647
    %v795 = vpack.c.bf16 %v466, %v462
    %v796 = vpack.c.bf16 %v468, %v464
    %v797 = vpack.c.bf16 %v659, %v655
    %v798 = vpack.c.bf16 %v661, %v657
    %v799 = vpack.c.bf16 %v476, %v472
    %v800 = vpack.c.bf16 %v478, %v474
    %v801 = vpack.c.bf16 %v669, %v665
    %v802 = vpack.c.bf16 %v671, %v667
    %v803 = vpack.c.bf16 %v486, %v482
    %v804 = vpack.c.bf16 %v488, %v484
    %v805 = vpack.c.bf16 %v679, %v675
    %v806 = vpack.c.bf16 %v681, %v677
    %v807 = vpack.c.bf16 %v496, %v492
    %v808 = vpack.c.bf16 %v498, %v494
    %v809 = vpack.c.bf16 %v689, %v685
    %v810 = vpack.c.bf16 %v691, %v687
    %v811 = vpack.c.bf16 %v506, %v502
    %v812 = vpack.c.bf16 %v508, %v504
    %v813 = vpack.c.bf16 %v699, %v695
    %v814 = vpack.c.bf16 %v701, %v697
    %v815 = vpack.c.bf16 %v516, %v512
    %v816 = vpack.c.bf16 %v518, %v514
    %v817 = vpack.c.bf16 %v709, %v705
    %v818 = vpack.c.bf16 %v711, %v707
    %v819 = vpack.c.bf16 %v526, %v522
    %v820 = vpack.c.bf16 %v528, %v524
    %v821 = vpack.c.bf16 %v719, %v715
    %v822 = vpack.c.bf16 %v721, %v717
    %v823 = vpack.c.bf16 %v536, %v532
    %v824 = vpack.c.bf16 %v538, %v534
    %v825 = vpack.c.bf16 %v729, %v725
    %v826 = vpack.c.bf16 %v731, %v727
    %v827 = vpack.c.bf16 %v546, %v542
    %v828 = vpack.c.bf16 %v548, %v544
    %v829 = vpack.c.bf16 %v739, %v735
    %v830 = vpack.c.bf16 %v741, %v737
    %v831 = vpack.c.bf16 %v556, %v552
    %v832 = vpack.c.bf16 %v558, %v554
    %v833 = vpack.c.bf16 %v749, %v745
    %v834 = vpack.c.bf16 %v751, %v747
    %v835 = vpack.c.bf16 %v566, %v562
    %v836 = vpack.c.bf16 %v568, %v564
    %v837 = vpack.c.bf16 %v759, %v755
    %v838 = vpack.c.bf16 %v761, %v757
    %v839 = vpack.c.bf16 %v576, %v572
    %v840 = vpack.c.bf16 %v578, %v574
    %v841 = vpack.c.bf16 %v769, %v765
    %v842 = vpack.c.bf16 %v771, %v767
    %v843 = vpack.c.bf16 %v586, %v582
    %v844 = vpack.c.bf16 %v588, %v584
    %v845 = vpack.c.bf16 %v779, %v775
    %v846 = vpack.c.bf16 %v781, %v777
    %v911 = vunpack.c.l.b16 %v783
    %v912 = vunpack.c.l.b16 %v784
    %v913 = vunpack.c.l.b16 %v785
    %v914 = vunpack.c.l.b16 %v786
    %v915 = vunpack.c.h.b16 %v783
    %v916 = vunpack.c.h.b16 %v784
    %v917 = vunpack.c.h.b16 %v785
    %v918 = vunpack.c.h.b16 %v786
    %v919 = vunpack.c.l.b16 %v787
    %v920 = vunpack.c.l.b16 %v788
    %v921 = vunpack.c.l.b16 %v789
    %v922 = vunpack.c.l.b16 %v790
    %v923 = vunpack.c.h.b16 %v787
    %v924 = vunpack.c.h.b16 %v788
    %v925 = vunpack.c.h.b16 %v789
    %v926 = vunpack.c.h.b16 %v790
    %v927 = vunpack.c.l.b16 %v791
    %v928 = vunpack.c.l.b16 %v792
    %v929 = vunpack.c.l.b16 %v793
    %v930 = vunpack.c.l.b16 %v794
    %v931 = vunpack.c.h.b16 %v791
    %v932 = vunpack.c.h.b16 %v792
    %v933 = vunpack.c.h.b16 %v793
    %v934 = vunpack.c.h.b16 %v794
    %v935 = vunpack.c.l.b16 %v795
    %v936 = vunpack.c.l.b16 %v796
    %v937 = vunpack.c.l.b16 %v797
    %v938 = vunpack.c.l.b16 %v798
    %v939 = vunpack.c.h.b16 %v795
    %v940 = vunpack.c.h.b16 %v796
    %v941 = vunpack.c.h.b16 %v797
    %v942 = vunpack.c.h.b16 %v798
    %v943 = vunpack.c.l.b16 %v799
    %v944 = vunpack.c.l.b16 %v800
    %v945 = vunpack.c.l.b16 %v801
    %v946 = vunpack.c.l.b16 %v802
    %v947 = vunpack.c.h.b16 %v799
    %v948 = vunpack.c.h.b16 %v800
    %v949 = vunpack.c.h.b16 %v801
    %v950 = vunpack.c.h.b16 %v802
    %v951 = vunpack.c.l.b16 %v803
    %v952 = vunpack.c.l.b16 %v804
    %v953 = vunpack.c.l.b16 %v805
    %v954 = vunpack.c.l.b16 %v806
    %v955 = vunpack.c.h.b16 %v803
    %v956 = vunpack.c.h.b16 %v804
    %v957 = vunpack.c.h.b16 %v805
    %v958 = vunpack.c.h.b16 %v806
    %v959 = vunpack.c.l.b16 %v807
    %v960 = vunpack.c.l.b16 %v808
    %v961 = vunpack.c.l.b16 %v809
    %v962 = vunpack.c.l.b16 %v810
    %v963 = vunpack.c.h.b16 %v807
    %v964 = vunpack.c.h.b16 %v808
    %v965 = vunpack.c.h.b16 %v809
    %v966 = vunpack.c.h.b16 %v810
    %v967 = vunpack.c.l.b16 %v811
    %v968 = vunpack.c.l.b16 %v812
    %v969 = vunpack.c.l.b16 %v813
    %v970 = vunpack.c.l.b16 %v814
    %v971 = vunpack.c.h.b16 %v811
    %v972 = vunpack.c.h.b16 %v812
    %v973 = vunpack.c.h.b16 %v813
    %v974 = vunpack.c.h.b16 %v814
    %v975 = vunpack.c.l.b16 %v815
    %v976 = vunpack.c.l.b16 %v816
    %v977 = vunpack.c.l.b16 %v817
    %v978 = vunpack.c.l.b16 %v818
    %v979 = vunpack.c.h.b16 %v815
    %v980 = vunpack.c.h.b16 %v816
    %v981 = vunpack.c.h.b16 %v817
    %v982 = vunpack.c.h.b16 %v818
    %v983 = vunpack.c.l.b16 %v819
    %v984 = vunpack.c.l.b16 %v820
    %v985 = vunpack.c.l.b16 %v821
    %v986 = vunpack.c.l.b16 %v822
    %v987 = vunpack.c.h.b16 %v819
    %v988 = vunpack.c.h.b16 %v820
    %v989 = vunpack.c.h.b16 %v821
    %v990 = vunpack.c.h.b16 %v822
    %v991 = vunpack.c.l.b16 %v823
    %v992 = vunpack.c.l.b16 %v824
    %v993 = vunpack.c.l.b16 %v825
    %v994 = vunpack.c.l.b16 %v826
    %v995 = vunpack.c.h.b16 %v823
    %v996 = vunpack.c.h.b16 %v824
    %v997 = vunpack.c.h.b16 %v825
    %v998 = vunpack.c.h.b16 %v826
    %v999 = vunpack.c.l.b16 %v827
    %v1000 = vunpack.c.l.b16 %v828
    %v1001 = vunpack.c.l.b16 %v829
    %v1002 = vunpack.c.l.b16 %v830
    %v1003 = vunpack.c.h.b16 %v827
    %v1004 = vunpack.c.h.b16 %v828
    %v1005 = vunpack.c.h.b16 %v829
    %v1006 = vunpack.c.h.b16 %v830
    %v1007 = vunpack.c.l.b16 %v831
    %v1008 = vunpack.c.l.b16 %v832
    %v1009 = vunpack.c.l.b16 %v833
    %v1010 = vunpack.c.l.b16 %v834
    %v1011 = vunpack.c.h.b16 %v831
    %v1012 = vunpack.c.h.b16 %v832
    %v1013 = vunpack.c.h.b16 %v833
    %v1014 = vunpack.c.h.b16 %v834
    %v1015 = vunpack.c.l.b16 %v835
    %v1016 = vunpack.c.l.b16 %v836
    %v1017 = vunpack.c.l.b16 %v837
    %v1018 = vunpack.c.l.b16 %v838
    %v1019 = vunpack.c.h.b16 %v835
    %v1020 = vunpack.c.h.b16 %v836
    %v1021 = vunpack.c.h.b16 %v837
    %v1022 = vunpack.c.h.b16 %v838
    %v1023 = vunpack.c.l.b16 %v839
    %v1024 = vunpack.c.l.b16 %v840
    %v1025 = vunpack.c.l.b16 %v841
    %v1026 = vunpack.c.l.b16 %v842
    %v1027 = vunpack.c.h.b16 %v839
    %v1028 = vunpack.c.h.b16 %v840
    %v1029 = vunpack.c.h.b16 %v841
    %v1030 = vunpack.c.h.b16 %v842
    %v1031 = vunpack.c.l.b16 %v843
    %v1032 = vunpack.c.l.b16 %v844
    %v1033 = vunpack.c.l.b16 %v845
    %v1034 = vunpack.c.l.b16 %v846
    %v1035 = vunpack.c.h.b16 %v843
    %v1036 = vunpack.c.h.b16 %v844
    %v1037 = vunpack.c.h.b16 %v845
    %v1038 = vunpack.c.h.b16 %v846
    %v1039 = vpack.c.b16 %v912, %v911
    %v1040 = vpack.c.b16 %v914, %v913
    %v1041 = vpack.c.b16 %v916, %v915
    %v1042 = vpack.c.b16 %v918, %v917
    %v1043 = vpack.c.b16 %v920, %v919
    %v1044 = vpack.c.b16 %v922, %v921
    %v1045 = vpack.c.b16 %v924, %v923
    %v1046 = vpack.c.b16 %v926, %v925
    %v1047 = vpack.c.b16 %v928, %v927
    %v1048 = vpack.c.b16 %v930, %v929
    %v1049 = vpack.c.b16 %v932, %v931
    %v1050 = vpack.c.b16 %v934, %v933
    %v1051 = vpack.c.b16 %v936, %v935
    %v1052 = vpack.c.b16 %v938, %v937
    %v1053 = vpack.c.b16 %v940, %v939
    %v1054 = vpack.c.b16 %v942, %v941
    %v1055 = vpack.c.b16 %v944, %v943
    %v1056 = vpack.c.b16 %v946, %v945
    %v1057 = vpack.c.b16 %v948, %v947
    %v1058 = vpack.c.b16 %v950, %v949
    %v1059 = vpack.c.b16 %v952, %v951
    %v1060 = vpack.c.b16 %v954, %v953
    %v1061 = vpack.c.b16 %v956, %v955
    %v1062 = vpack.c.b16 %v958, %v957
    %v1063 = vpack.c.b16 %v960, %v959
    %v1064 = vpack.c.b16 %v962, %v961
    %v1065 = vpack.c.b16 %v964, %v963
    %v1066 = vpack.c.b16 %v966, %v965
    %v1067 = vpack.c.b16 %v968, %v967
    %v1068 = vpack.c.b16 %v970, %v969
    %v1069 = vpack.c.b16 %v972, %v971
    %v1070 = vpack.c.b16 %v974, %v973
    %v1071 = vpack.c.b16 %v976, %v975
    %v1072 = vpack.c.b16 %v978, %v977
    %v1073 = vpack.c.b16 %v980, %v979
    %v1074 = vpack.c.b16 %v982, %v981
    %v1075 = vpack.c.b16 %v984, %v983
    %v1076 = vpack.c.b16 %v986, %v985
    %v1077 = vpack.c.b16 %v988, %v987
    %v1078 = vpack.c.b16 %v990, %v989
    %v1079 = vpack.c.b16 %v992, %v991
    %v1080 = vpack.c.b16 %v994, %v993
    %v1081 = vpack.c.b16 %v996, %v995
    %v1082 = vpack.c.b16 %v998, %v997
    %v1083 = vpack.c.b16 %v1000, %v999
    %v1084 = vpack.c.b16 %v1002, %v1001
    %v1085 = vpack.c.b16 %v1004, %v1003
    %v1086 = vpack.c.b16 %v1006, %v1005
    %v1087 = vpack.c.b16 %v1008, %v1007
    %v1088 = vpack.c.b16 %v1010, %v1009
    %v1089 = vpack.c.b16 %v1012, %v1011
    %v1090 = vpack.c.b16 %v1014, %v1013
    %v1091 = vpack.c.b16 %v1016, %v1015
    %v1092 = vpack.c.b16 %v1018, %v1017
    %v1093 = vpack.c.b16 %v1020, %v1019
    %v1094 = vpack.c.b16 %v1022, %v1021
    %v1095 = vpack.c.b16 %v1024, %v1023
    %v1096 = vpack.c.b16 %v1026, %v1025
    %v1097 = vpack.c.b16 %v1028, %v1027
    %v1098 = vpack.c.b16 %v1030, %v1029
    %v1099 = vpack.c.b16 %v1032, %v1031
    %v1100 = vpack.c.b16 %v1034, %v1033
    %v1101 = vpack.c.b16 %v1036, %v1035
    %v1102 = vpack.c.b16 %v1038, %v1037
    %1167 = vst [vmem:[#allocation8] sm:$0xff] %v1039
    %1168 = vst [vmem:[#allocation8 + $0x8] sm:$0xff] %v1040
    %1169 = vst [vmem:[#allocation8 + $0x10] sm:$0xff] %v1041
    %1170 = vst [vmem:[#allocation8 + $0x18] sm:$0xff] %v1042
    %1171 = vst [vmem:[#allocation8 + $0x20] sm:$0xff] %v1043
    %1172 = vst [vmem:[#allocation8 + $0x28] sm:$0xff] %v1044
    %1173 = vst [vmem:[#allocation8 + $0x30] sm:$0xff] %v1045
    %1174 = vst [vmem:[#allocation8 + $0x38] sm:$0xff] %v1046
    %1175 = vst [vmem:[#allocation8 + $0x40] sm:$0xff] %v1047
    %1176 = vst [vmem:[#allocation8 + $0x48] sm:$0xff] %v1048
    %1177 = vst [vmem:[#allocation8 + $0x50] sm:$0xff] %v1049
    %1178 = vst [vmem:[#allocation8 + $0x58] sm:$0xff] %v1050
    %1179 = vst [vmem:[#allocation8 + $0x60] sm:$0xff] %v1051
    %1180 = vst [vmem:[#allocation8 + $0x68] sm:$0xff] %v1052
    %1181 = vst [vmem:[#allocation8 + $0x70] sm:$0xff] %v1053
    %1182 = vst [vmem:[#allocation8 + $0x78] sm:$0xff] %v1054
    %1183 = vst [vmem:[#allocation8 + $0x80] sm:$0xff] %v1055
    %1184 = vst [vmem:[#allocation8 + $0x88] sm:$0xff] %v1056
    %1185 = vst [vmem:[#allocation8 + $0x90] sm:$0xff] %v1057
    %1186 = vst [vmem:[#allocation8 + $0x98] sm:$0xff] %v1058
    %1187 = vst [vmem:[#allocation8 + $0xa0] sm:$0xff] %v1059
    %1188 = vst [vmem:[#allocation8 + $0xa8] sm:$0xff] %v1060
    %1189 = vst [vmem:[#allocation8 + $0xb0] sm:$0xff] %v1061
    %1190 = vst [vmem:[#allocation8 + $0xb8] sm:$0xff] %v1062
    %1191 = vst [vmem:[#allocation8 + $0xc0] sm:$0xff] %v1063
    %1192 = vst [vmem:[#allocation8 + $0xc8] sm:$0xff] %v1064
    %1193 = vst [vmem:[#allocation8 + $0xd0] sm:$0xff] %v1065
    %1194 = vst [vmem:[#allocation8 + $0xd8] sm:$0xff] %v1066
    %1195 = vst [vmem:[#allocation8 + $0xe0] sm:$0xff] %v1067
    %1196 = vst [vmem:[#allocation8 + $0xe8] sm:$0xff] %v1068
    %1197 = vst [vmem:[#allocation8 + $0xf0] sm:$0xff] %v1069
    %1198 = vst [vmem:[#allocation8 + $0xf8] sm:$0xff] %v1070
    %1199 = vst [vmem:[#allocation8 + $0x100] sm:$0xff] %v1071
    %1200 = vst [vmem:[#allocation8 + $0x108] sm:$0xff] %v1072
    %1201 = vst [vmem:[#allocation8 + $0x110] sm:$0xff] %v1073
    %1202 = vst [vmem:[#allocation8 + $0x118] sm:$0xff] %v1074
    %1203 = vst [vmem:[#allocation8 + $0x120] sm:$0xff] %v1075
    %1204 = vst [vmem:[#allocation8 + $0x128] sm:$0xff] %v1076
    %1205 = vst [vmem:[#allocation8 + $0x130] sm:$0xff] %v1077
    %1206 = vst [vmem:[#allocation8 + $0x138] sm:$0xff] %v1078
    %1207 = vst [vmem:[#allocation8 + $0x140] sm:$0xff] %v1079
    %1208 = vst [vmem:[#allocation8 + $0x148] sm:$0xff] %v1080
    %1209 = vst [vmem:[#allocation8 + $0x150] sm:$0xff] %v1081
    %1210 = vst [vmem:[#allocation8 + $0x158] sm:$0xff] %v1082
    %1211 = vst [vmem:[#allocation8 + $0x160] sm:$0xff] %v1083
    %1212 = vst [vmem:[#allocation8 + $0x168] sm:$0xff] %v1084
    %1213 = vst [vmem:[#allocation8 + $0x170] sm:$0xff] %v1085
    %1214 = vst [vmem:[#allocation8 + $0x178] sm:$0xff] %v1086
    %1215 = vst [vmem:[#allocation8 + $0x180] sm:$0xff] %v1087
    %1216 = vst [vmem:[#allocation8 + $0x188] sm:$0xff] %v1088
    %1217 = vst [vmem:[#allocation8 + $0x190] sm:$0xff] %v1089
    %1218 = vst [vmem:[#allocation8 + $0x198] sm:$0xff] %v1090
    %1219 = vst [vmem:[#allocation8 + $0x1a0] sm:$0xff] %v1091
    %1220 = vst [vmem:[#allocation8 + $0x1a8] sm:$0xff] %v1092
    %1221 = vst [vmem:[#allocation8 + $0x1b0] sm:$0xff] %v1093
    %1222 = vst [vmem:[#allocation8 + $0x1b8] sm:$0xff] %v1094
    %1223 = vst [vmem:[#allocation8 + $0x1c0] sm:$0xff] %v1095
    %1224 = vst [vmem:[#allocation8 + $0x1c8] sm:$0xff] %v1096
    %1225 = vst [vmem:[#allocation8 + $0x1d0] sm:$0xff] %v1097
    %1226 = vst [vmem:[#allocation8 + $0x1d8] sm:$0xff] %v1098
    %1227 = vst [vmem:[#allocation8 + $0x1e0] sm:$0xff] %v1099
    %1228 = vst [vmem:[#allocation8 + $0x1e8] sm:$0xff] %v1100
    %1229 = vst [vmem:[#allocation8 + $0x1f0] sm:$0xff] %v1101
    %1230 = vst [vmem:[#allocation8 + $0x1f8] sm:$0xff] %v1102
    // Predicated region
    $region26: #{tpu_custom_call.1} parent=1 // pred_check
      _
    $region27: #{tpu_custom_call.1} parent=1 // pred_check_branch
      %1232 = sbr.rel (0) target = $region29
    $region28: #{tpu_custom_call.1} parent=1 // pred_region
      %s1234 = ssub.s32 8192, 8192
      %1235 = vsyncadd [#allocation4], %s1234
      %s1236 = sshll.u32 [#allocation8], 4
      %s1237 = int_to_ptr.vmem [resolvable:$true] %s1236
      %1242 = dma.vmem_to_hbm [thread:$0]  %s1237, 8192, %s3, [#allocation4], 256, 256, 16
    $region29: #{tpu_custom_call.1} parent=1 // pred_fallthru
      _
    // Predicated region
    $region30: #{tpu_custom_call.1} parent=1 // pred_check
      _
    $region31: #{tpu_custom_call.1} parent=1 // pred_check_branch
      %1244 = sbr.rel (0) target = $region33
    $region32: #{tpu_custom_call.1} parent=1 // pred_region
      %1245 = dma.done [#allocation4], 8192
    $region33: #{tpu_custom_call.1} parent=1 // pred_fallthru
      _
    %1246 = vsyncpa [#allocation3], 1
    %1247 = vsyncpa [#allocation6], 1
    %1248 = vsyncpa [#allocation4], 1

</llo_original>
